<compile_context>
chip_gen: v7x
topology: tpu7x:2x2x1
jax: 0.10.0
libtpu: 0.0.40
codegen_flags: <defaults>
</compile_context>

<pallas_src>
import jax
import jax.numpy as jnp
from jax.experimental import pallas as pl
from jax.experimental.pallas import tpu as pltpu


def _leaky(v):
    return jnp.where(v > 0, v, 0.01 * v)


def _round_up(n, m):
    return ((n + m - 1) // m) * m


def _autoencoder_kernel(
    wec_s,     # SMEM (O*C*K,)   encoder conv weights, O=2, K=2
    bec_s,     # SMEM (O,)
    wdc_s,     # SMEM (C*K,)     decoder conv-transpose weights (in_ch=1)
    bdc_s,     # SMEM (C,)
    x_ref,     # VMEM (C, Bt, L)
    swed_ref,  # VMEM (L, L//4)  encoder dense weight, pool selector folded in
    bed_ref,   # VMEM (1, L//4)
    wdd_ref,   # VMEM (L//4, L-1) decoder dense weight, zero last column
    bdd_ref,   # VMEM (1, L-1)    decoder dense bias, zero last entry
    out_ref,   # VMEM (C, Bt, L-1)
):
    C, Bt, L = x_ref.shape
    K = 2  # conv kernel size

    # ---- encoder Conv1d(k=2) as VPU broadcast FMAs over (Bt, L) slabs ----
    # Accumulate tap-0 / tap-1 partial sums per output channel (O=2); the
    # tap-1 sum is shifted by one lane with a single XLU roll afterwards.
    a0 = jnp.zeros((Bt, L), jnp.float32)
    b0 = jnp.zeros((Bt, L), jnp.float32)
    a1 = jnp.zeros((Bt, L), jnp.float32)
    b1 = jnp.zeros((Bt, L), jnp.float32)
    for c in range(C):
        xc = x_ref[c]                                   # (Bt, L), contiguous
        a0 = a0 + wec_s[(0 * C + c) * K + 0] * xc
        b0 = b0 + wec_s[(0 * C + c) * K + 1] * xc
        a1 = a1 + wec_s[(1 * C + c) * K + 0] * xc
        b1 = b1 + wec_s[(1 * C + c) * K + 1] * xc
    # roll(v, L-1)[t] == v[t+1 (mod L)]; the wrapped lane L-1 is never used.
    h0 = _leaky(a0 + pltpu.roll(b0, L - 1, 1) + bec_s[0])
    h1 = _leaky(a1 + pltpu.roll(b1, L - 1, 1) + bec_s[1])

    # ---- MaxPool2d(2): channel-pair max + length-pair max (no scratch) ----
    m = jnp.maximum(h0, h1)                             # (Bt, L)
    pm = jnp.maximum(m, pltpu.roll(m, L - 1, 1))        # pm[t] = max(m[t], m[t+1])
    # The even-lane selection is folded into swed_ref offline (zero rows for
    # odd / out-of-range lanes), so pm feeds the matmul directly.

    # ---- encoder dense + leaky (batched MXU matmul, M = Bt) ----
    y = jnp.dot(pm, swed_ref[...], preferred_element_type=jnp.float32)
    y = _leaky(y + bed_ref[...])                        # (Bt, L//4)

    # ---- decoder dense + leaky, padded to width L-1 (last column == 0) ----
    z = jnp.dot(y, wdd_ref[...], preferred_element_type=jnp.float32)
    z = _leaky(z + bdd_ref[...])                        # (Bt, L-1), z[:, -1] == 0

    # ---- decoder ConvTranspose1d(k=2) as VPU broadcast mul-adds ----
    zl = pltpu.roll(z, 1, 1)                            # [0, z0, ..., z_{L-3}]
    for c in range(C):
        # Full-slab, lane-dense, non-overlapping store per output channel.
        out_ref[c] = bdc_s[c] + wdc_s[c * K + 0] * z + wdc_s[c * K + 1] * zl


def autoencoder_forward(x, params, *, batch_tile=128):
    """x: (B, C, L) float32, NCL layout (like PyTorch Conv1d). Returns (B, C, L-1)."""
    wec, bec, wed, bed, wdd, bdd, wdc, bdc = params
    B, C, L = x.shape
    O, _, K = wec.shape
    assert O == 2 and K == 2, "module semantics require output_channels=2, kernel_size=2"
    assert L % 2 == 0 and L >= 4
    Lc = L - 1
    L4 = L // 4
    Tp = L // 2 - 1

    # ---- batch tiling: fold the batch into the matmul M dimension ----
    Bt = min(_round_up(B, 8), batch_tile)
    Bp = _round_up(B, Bt)
    if Bp != B:
        x = jnp.concatenate([x, jnp.zeros((Bp - B, C, L), x.dtype)], axis=0)
    xT = jnp.transpose(x, (1, 0, 2)).astype(jnp.float32)        # (C, Bp, L)

    # ---- tiny conv params -> flat f32 SMEM arrays ----
    wec_flat = wec.reshape(-1).astype(jnp.float32)              # (O*C*K,)
    bec_flat = bec.reshape(-1).astype(jnp.float32)              # (O,)
    wdc_flat = wdc[0].reshape(-1).astype(jnp.float32)           # (C*K,)
    bdc_flat = bdc.reshape(-1).astype(jnp.float32)              # (C,)

    # ---- fold the maxpool even-lane selector into the encoder dense weight ----
    # S[(2j), j] = 1  =>  swed = S @ wed.T, shape (L, L//4), zero rows elsewhere.
    swed = jnp.zeros((L, L4), jnp.float32).at[0:2 * Tp:2, :].set(
        wed.T.astype(jnp.float32))
    bed_row = bed.reshape(1, L4).astype(jnp.float32)

    # ---- pad decoder dense to width L-1: the extra exactly-zero column is the
    # right-pad of the conv-transpose tap-0 slab. ----
    wdd_pad = jnp.zeros((L4, Lc), jnp.float32).at[:, : L - 2].set(
        wdd.T.astype(jnp.float32))
    bdd_pad = jnp.zeros((1, Lc), jnp.float32).at[0, : L - 2].set(
        bdd.astype(jnp.float32))

    smem_spec = pl.BlockSpec(memory_space=pltpu.MemorySpace.SMEM)
    grid_spec = pltpu.PrefetchScalarGridSpec(
        num_scalar_prefetch=0,
        grid=(Bp // Bt,),
        in_specs=[
            smem_spec,                                          # wec
            smem_spec,                                          # bec
            smem_spec,                                          # wdc
            smem_spec,                                          # bdc
            pl.BlockSpec((C, Bt, L), lambda b: (0, b, 0)),      # x (C, Bt, L)
            pl.BlockSpec((L, L4), lambda b: (0, 0)),            # swed
            pl.BlockSpec((1, L4), lambda b: (0, 0)),            # bed
            pl.BlockSpec((L4, Lc), lambda b: (0, 0)),           # wdd_pad
            pl.BlockSpec((1, Lc), lambda b: (0, 0)),            # bdd_pad
        ],
        out_specs=pl.BlockSpec((C, Bt, Lc), lambda b: (0, b, 0)),
    )

    outT = pl.pallas_call(
        _autoencoder_kernel,
        out_shape=jax.ShapeDtypeStruct((C, Bp, Lc), jnp.float32),
        grid_spec=grid_spec,
        compiler_params=pltpu.CompilerParams(
            dimension_semantics=("parallel",)),
    )(wec_flat, bec_flat, wdc_flat, bdc_flat, xT, swed, bed_row, wdd_pad, bdd_pad)

    return jnp.transpose(outT, (1, 0, 2))[:B]


def reference_forward(x, params):
    """Pure-JAX reference matching the PyTorch forward exactly."""
    wec, bec, wed, bed, wdd, bdd, wdc, bdc = params
    B, C, L = x.shape
    h = (jnp.einsum('oc,bct->bot', wec[:, :, 0], x[:, :, :-1])
         + jnp.einsum('oc,bct->bot', wec[:, :, 1], x[:, :, 1:])
         + bec[None, :, None])
    h = _leaky(h)
    _, O, T = h.shape
    hp = h[:, :(O // 2) * 2, :(T // 2) * 2].reshape(
        B, O // 2, 2, T // 2, 2).max(axis=(2, 4))               # (B, 1, T//2)
    y = _leaky(jnp.einsum('bct,ut->bcu', hp, wed) + bed[None, None, :])
    z = _leaky(jnp.einsum('bcu,vu->bcv', y, wdd) + bdd[None, None, :])
    d = z[:, 0, :]                                               # (B, L-2)
    out = jnp.zeros((B, C, T), jnp.float32)
    out = out.at[:, :, :-1].add(d[:, None, :] * wdc[0, :, 0][None, :, None])
    out = out.at[:, :, 1:].add(d[:, None, :] * wdc[0, :, 1][None, :, None])
    out = out + bdc[None, :, None]
    return out


def init_params(key, C, L, output_channels=2, kernel_size=2):
    ks = jax.random.split(key, 8)
    u = lambda k, shape, s: jax.random.uniform(k, shape, jnp.float32, -s, s)
    wec = u(ks[0], (output_channels, C, kernel_size), 0.3)
    bec = u(ks[1], (output_channels,), 0.3)
    wed = u(ks[2], (L // 4, L // 2 - 1), 0.3)
    bed = u(ks[3], (L // 4,), 0.3)
    wdd = u(ks[4], (L - 2, L // 4), 0.3)
    bdd = u(ks[5], (L - 2,), 0.3)
    wdc = u(ks[6], (output_channels - 1, C, kernel_size), 0.3)
    bdc = u(ks[7], (C,), 0.3)
    return (wec, bec, wed, bed, wdd, bdd, wdc, bdc)


if __name__ == "__main__":
    B, C, L = 2, 4, 16  # batch, input_channels, seq_len
    key = jax.random.PRNGKey(0)
    kx, kp = jax.random.split(key)
    x = jax.random.normal(kx, (B, C, L), dtype=jnp.float32)
    params = init_params(kp, C, L)

    out = autoencoder_forward(x, params)
    out = jax.block_until_ready(out)

    ref = reference_forward(x, params)
    assert out.shape == (B, C, L - 1), out.shape
    assert jnp.allclose(out, ref, atol=1e-4, rtol=1e-4), (
        float(jnp.max(jnp.abs(out - ref))))
    print("KERNEL_OK")
</pallas_src>

<mosaic_0001>
module attributes {stable_mosaic.version = 11 : i64} {
  func.func @_autoencoder_kernel(%arg0: i32, %arg1: memref<16xf32, #tpu.memory_space<smem>>, %arg2: memref<2xf32, #tpu.memory_space<smem>>, %arg3: memref<8xf32, #tpu.memory_space<smem>>, %arg4: memref<4xf32, #tpu.memory_space<smem>>, %arg5: memref<4x8x16xf32, #tpu.memory_space<vmem>>, %arg6: memref<16x4xf32, #tpu.memory_space<vmem>>, %arg7: memref<1x4xf32, #tpu.memory_space<vmem>>, %arg8: memref<4x15xf32, #tpu.memory_space<vmem>>, %arg9: memref<1x15xf32, #tpu.memory_space<vmem>>, %arg10: memref<4x8x15xf32, #tpu.memory_space<vmem>>) attributes {dimension_semantics = [#tpu.dimension_semantics<parallel>], iteration_bounds = array<i64: 1>, scalar_prefetch = 0 : i64, scratch_operands = 0 : i64, tpu.core_type = #tpu.core_type<tc>, window_params = [{transform_indices = @transform_0, window_bounds = array<i64: 16>}, {transform_indices = @transform_1, window_bounds = array<i64: 2>}, {transform_indices = @transform_2, window_bounds = array<i64: 8>}, {transform_indices = @transform_3, window_bounds = array<i64: 4>}, {transform_indices = @transform_4, window_bounds = array<i64: 4, 8, 16>}, {pipeline_mode = #tpu.pipeline_mode<synchronous>, transform_indices = @transform_5, window_bounds = array<i64: 16, 4>}, {pipeline_mode = #tpu.pipeline_mode<synchronous>, transform_indices = @transform_6, window_bounds = array<i64: 1, 4>}, {pipeline_mode = #tpu.pipeline_mode<synchronous>, transform_indices = @transform_7, window_bounds = array<i64: 4, 15>}, {pipeline_mode = #tpu.pipeline_mode<synchronous>, transform_indices = @transform_8, window_bounds = array<i64: 1, 15>}, {transform_indices = @transform_9, window_bounds = array<i64: 4, 8, 15>}]} {
    %cst = arith.constant 0.000000e+00 : f32
    %0 = vector.broadcast %cst : f32 to vector<8x16xf32>
    %cst_0 = arith.constant 0.000000e+00 : f32
    %1 = vector.broadcast %cst_0 : f32 to vector<8x16xf32>
    %cst_1 = arith.constant 0.000000e+00 : f32
    %2 = vector.broadcast %cst_1 : f32 to vector<8x16xf32>
    %cst_2 = arith.constant 0.000000e+00 : f32
    %3 = vector.broadcast %cst_2 : f32 to vector<8x16xf32>
    %c0 = arith.constant 0 : index
    %c0_3 = arith.constant 0 : index
    %c0_4 = arith.constant 0 : index
    %4 = vector.load %arg5[%c0, %c0_3, %c0_4] : memref<4x8x16xf32, #tpu.memory_space<vmem>>, vector<1x8x16xf32>
    %5 = vector.shape_cast %4 : vector<1x8x16xf32> to vector<8x16xf32>
    %c0_5 = arith.constant 0 : index
    %6 = memref.load %arg1[%c0_5] : memref<16xf32, #tpu.memory_space<smem>>
    %7 = vector.broadcast %6 : f32 to vector<8x16xf32>
    %8 = arith.mulf %7, %5 : vector<8x16xf32>
    %9 = arith.addf %0, %8 : vector<8x16xf32>
    %c1 = arith.constant 1 : index
    %10 = memref.load %arg1[%c1] : memref<16xf32, #tpu.memory_space<smem>>
    %11 = vector.broadcast %10 : f32 to vector<8x16xf32>
    %12 = arith.mulf %11, %5 : vector<8x16xf32>
    %13 = arith.addf %1, %12 : vector<8x16xf32>
    %c8 = arith.constant 8 : index
    %14 = memref.load %arg1[%c8] : memref<16xf32, #tpu.memory_space<smem>>
    %15 = vector.broadcast %14 : f32 to vector<8x16xf32>
    %16 = arith.mulf %15, %5 : vector<8x16xf32>
    %17 = arith.addf %2, %16 : vector<8x16xf32>
    %c9 = arith.constant 9 : index
    %18 = memref.load %arg1[%c9] : memref<16xf32, #tpu.memory_space<smem>>
    %19 = vector.broadcast %18 : f32 to vector<8x16xf32>
    %20 = arith.mulf %19, %5 : vector<8x16xf32>
    %21 = arith.addf %3, %20 : vector<8x16xf32>
    %c1_6 = arith.constant 1 : index
    %c0_7 = arith.constant 0 : index
    %c0_8 = arith.constant 0 : index
    %22 = vector.load %arg5[%c1_6, %c0_7, %c0_8] : memref<4x8x16xf32, #tpu.memory_space<vmem>>, vector<1x8x16xf32>
    %23 = vector.shape_cast %22 : vector<1x8x16xf32> to vector<8x16xf32>
    %c2 = arith.constant 2 : index
    %24 = memref.load %arg1[%c2] : memref<16xf32, #tpu.memory_space<smem>>
    %25 = vector.broadcast %24 : f32 to vector<8x16xf32>
    %26 = arith.mulf %25, %23 : vector<8x16xf32>
    %27 = arith.addf %9, %26 : vector<8x16xf32>
    %c3 = arith.constant 3 : index
    %28 = memref.load %arg1[%c3] : memref<16xf32, #tpu.memory_space<smem>>
    %29 = vector.broadcast %28 : f32 to vector<8x16xf32>
    %30 = arith.mulf %29, %23 : vector<8x16xf32>
    %31 = arith.addf %13, %30 : vector<8x16xf32>
    %c10 = arith.constant 10 : index
    %32 = memref.load %arg1[%c10] : memref<16xf32, #tpu.memory_space<smem>>
    %33 = vector.broadcast %32 : f32 to vector<8x16xf32>
    %34 = arith.mulf %33, %23 : vector<8x16xf32>
    %35 = arith.addf %17, %34 : vector<8x16xf32>
    %c11 = arith.constant 11 : index
    %36 = memref.load %arg1[%c11] : memref<16xf32, #tpu.memory_space<smem>>
    %37 = vector.broadcast %36 : f32 to vector<8x16xf32>
    %38 = arith.mulf %37, %23 : vector<8x16xf32>
    %39 = arith.addf %21, %38 : vector<8x16xf32>
    %c2_9 = arith.constant 2 : index
    %c0_10 = arith.constant 0 : index
    %c0_11 = arith.constant 0 : index
    %40 = vector.load %arg5[%c2_9, %c0_10, %c0_11] : memref<4x8x16xf32, #tpu.memory_space<vmem>>, vector<1x8x16xf32>
    %41 = vector.shape_cast %40 : vector<1x8x16xf32> to vector<8x16xf32>
    %c4 = arith.constant 4 : index
    %42 = memref.load %arg1[%c4] : memref<16xf32, #tpu.memory_space<smem>>
    %43 = vector.broadcast %42 : f32 to vector<8x16xf32>
    %44 = arith.mulf %43, %41 : vector<8x16xf32>
    %45 = arith.addf %27, %44 : vector<8x16xf32>
    %c5 = arith.constant 5 : index
    %46 = memref.load %arg1[%c5] : memref<16xf32, #tpu.memory_space<smem>>
    %47 = vector.broadcast %46 : f32 to vector<8x16xf32>
    %48 = arith.mulf %47, %41 : vector<8x16xf32>
    %49 = arith.addf %31, %48 : vector<8x16xf32>
    %c12 = arith.constant 12 : index
    %50 = memref.load %arg1[%c12] : memref<16xf32, #tpu.memory_space<smem>>
    %51 = vector.broadcast %50 : f32 to vector<8x16xf32>
    %52 = arith.mulf %51, %41 : vector<8x16xf32>
    %53 = arith.addf %35, %52 : vector<8x16xf32>
    %c13 = arith.constant 13 : index
    %54 = memref.load %arg1[%c13] : memref<16xf32, #tpu.memory_space<smem>>
    %55 = vector.broadcast %54 : f32 to vector<8x16xf32>
    %56 = arith.mulf %55, %41 : vector<8x16xf32>
    %57 = arith.addf %39, %56 : vector<8x16xf32>
    %c3_12 = arith.constant 3 : index
    %c0_13 = arith.constant 0 : index
    %c0_14 = arith.constant 0 : index
    %58 = vector.load %arg5[%c3_12, %c0_13, %c0_14] : memref<4x8x16xf32, #tpu.memory_space<vmem>>, vector<1x8x16xf32>
    %59 = vector.shape_cast %58 : vector<1x8x16xf32> to vector<8x16xf32>
    %c6 = arith.constant 6 : index
    %60 = memref.load %arg1[%c6] : memref<16xf32, #tpu.memory_space<smem>>
    %61 = vector.broadcast %60 : f32 to vector<8x16xf32>
    %62 = arith.mulf %61, %59 : vector<8x16xf32>
    %63 = arith.addf %45, %62 : vector<8x16xf32>
    %c7 = arith.constant 7 : index
    %64 = memref.load %arg1[%c7] : memref<16xf32, #tpu.memory_space<smem>>
    %65 = vector.broadcast %64 : f32 to vector<8x16xf32>
    %66 = arith.mulf %65, %59 : vector<8x16xf32>
    %67 = arith.addf %49, %66 : vector<8x16xf32>
    %c14 = arith.constant 14 : index
    %68 = memref.load %arg1[%c14] : memref<16xf32, #tpu.memory_space<smem>>
    %69 = vector.broadcast %68 : f32 to vector<8x16xf32>
    %70 = arith.mulf %69, %59 : vector<8x16xf32>
    %71 = arith.addf %53, %70 : vector<8x16xf32>
    %c15 = arith.constant 15 : index
    %72 = memref.load %arg1[%c15] : memref<16xf32, #tpu.memory_space<smem>>
    %73 = vector.broadcast %72 : f32 to vector<8x16xf32>
    %74 = arith.mulf %73, %59 : vector<8x16xf32>
    %75 = arith.addf %57, %74 : vector<8x16xf32>
    %c15_i32 = arith.constant 15 : i32
    %76 = tpu.dynamic_rotate %67 by %c15_i32 dim 1 : vector<8x16xf32>, i32 -> vector<8x16xf32>
    %77 = arith.addf %63, %76 : vector<8x16xf32>
    %c0_15 = arith.constant 0 : index
    %78 = memref.load %arg2[%c0_15] : memref<2xf32, #tpu.memory_space<smem>>
    %79 = vector.broadcast %78 : f32 to vector<8x16xf32>
    %80 = arith.addf %77, %79 : vector<8x16xf32>
    %cst_16 = arith.constant 0.000000e+00 : f32
    %81 = vector.broadcast %cst_16 : f32 to vector<8x16xf32>
    %82 = arith.cmpf ogt, %80, %81 : vector<8x16xf32>
    %cst_17 = arith.constant 0.00999999977 : f32
    %83 = vector.broadcast %cst_17 : f32 to vector<8x16xf32>
    %84 = arith.mulf %83, %80 : vector<8x16xf32>
    %85 = arith.select %82, %80, %84 : vector<8x16xi1>, vector<8x16xf32>
    %c15_i32_18 = arith.constant 15 : i32
    %86 = tpu.dynamic_rotate %75 by %c15_i32_18 dim 1 : vector<8x16xf32>, i32 -> vector<8x16xf32>
    %87 = arith.addf %71, %86 : vector<8x16xf32>
    %c1_19 = arith.constant 1 : index
    %88 = memref.load %arg2[%c1_19] : memref<2xf32, #tpu.memory_space<smem>>
    %89 = vector.broadcast %88 : f32 to vector<8x16xf32>
    %90 = arith.addf %87, %89 : vector<8x16xf32>
    %cst_20 = arith.constant 0.000000e+00 : f32
    %91 = vector.broadcast %cst_20 : f32 to vector<8x16xf32>
    %92 = arith.cmpf ogt, %90, %91 : vector<8x16xf32>
    %cst_21 = arith.constant 0.00999999977 : f32
    %93 = vector.broadcast %cst_21 : f32 to vector<8x16xf32>
    %94 = arith.mulf %93, %90 : vector<8x16xf32>
    %95 = arith.select %92, %90, %94 : vector<8x16xi1>, vector<8x16xf32>
    %96 = arith.maximumf %85, %95 : vector<8x16xf32>
    %c15_i32_22 = arith.constant 15 : i32
    %97 = tpu.dynamic_rotate %96 by %c15_i32_22 dim 1 : vector<8x16xf32>, i32 -> vector<8x16xf32>
    %98 = arith.maximumf %96, %97 : vector<8x16xf32>
    %c0_23 = arith.constant 0 : index
    %c0_24 = arith.constant 0 : index
    %99 = vector.load %arg6[%c0_23, %c0_24] : memref<16x4xf32, #tpu.memory_space<vmem>>, vector<16x4xf32>
    %cst_25 = arith.constant dense<0.000000e+00> : vector<8x4xf32>
    %100 = tpu.matmul %98, %99, %cst_25 {dimension_numbers = #tpu.dot_dimension_numbers<[1], [0], [0], [1], [0, 0, 1, 1], [], []>} : vector<8x16xf32>, vector<16x4xf32>, vector<8x4xf32> -> vector<8x4xf32>
    %c0_26 = arith.constant 0 : index
    %c0_27 = arith.constant 0 : index
    %101 = vector.load %arg7[%c0_26, %c0_27] : memref<1x4xf32, #tpu.memory_space<vmem>>, vector<1x4xf32>
    %102 = vector.broadcast %101 : vector<1x4xf32> to vector<8x4xf32>
    %103 = arith.addf %100, %102 : vector<8x4xf32>
    %cst_28 = arith.constant 0.000000e+00 : f32
    %104 = vector.broadcast %cst_28 : f32 to vector<8x4xf32>
    %105 = arith.cmpf ogt, %103, %104 : vector<8x4xf32>
    %cst_29 = arith.constant 0.00999999977 : f32
    %106 = vector.broadcast %cst_29 : f32 to vector<8x4xf32>
    %107 = arith.mulf %106, %103 : vector<8x4xf32>
    %108 = arith.select %105, %103, %107 : vector<8x4xi1>, vector<8x4xf32>
    %c0_30 = arith.constant 0 : index
    %c0_31 = arith.constant 0 : index
    %109 = vector.load %arg8[%c0_30, %c0_31] : memref<4x15xf32, #tpu.memory_space<vmem>>, vector<4x15xf32>
    %cst_32 = arith.constant dense<0.000000e+00> : vector<8x15xf32>
    %110 = tpu.matmul %108, %109, %cst_32 {dimension_numbers = #tpu.dot_dimension_numbers<[1], [0], [0], [1], [0, 0, 1, 1], [], []>} : vector<8x4xf32>, vector<4x15xf32>, vector<8x15xf32> -> vector<8x15xf32>
    %c0_33 = arith.constant 0 : index
    %c0_34 = arith.constant 0 : index
    %111 = vector.load %arg9[%c0_33, %c0_34] : memref<1x15xf32, #tpu.memory_space<vmem>>, vector<1x15xf32>
    %112 = vector.broadcast %111 : vector<1x15xf32> to vector<8x15xf32>
    %113 = arith.addf %110, %112 : vector<8x15xf32>
    %cst_35 = arith.constant 0.000000e+00 : f32
    %114 = vector.broadcast %cst_35 : f32 to vector<8x15xf32>
    %115 = arith.cmpf ogt, %113, %114 : vector<8x15xf32>
    %cst_36 = arith.constant 0.00999999977 : f32
    %116 = vector.broadcast %cst_36 : f32 to vector<8x15xf32>
    %117 = arith.mulf %116, %113 : vector<8x15xf32>
    %118 = arith.select %115, %113, %117 : vector<8x15xi1>, vector<8x15xf32>
    %c1_i32 = arith.constant 1 : i32
    %119 = tpu.dynamic_rotate %118 by %c1_i32 dim 1 : vector<8x15xf32>, i32 -> vector<8x15xf32>
    %c0_37 = arith.constant 0 : index
    %120 = memref.load %arg4[%c0_37] : memref<4xf32, #tpu.memory_space<smem>>
    %c0_38 = arith.constant 0 : index
    %121 = memref.load %arg3[%c0_38] : memref<8xf32, #tpu.memory_space<smem>>
    %122 = vector.broadcast %121 : f32 to vector<8x15xf32>
    %123 = arith.mulf %122, %118 : vector<8x15xf32>
    %124 = vector.broadcast %120 : f32 to vector<8x15xf32>
    %125 = arith.addf %124, %123 : vector<8x15xf32>
    %c1_39 = arith.constant 1 : index
    %126 = memref.load %arg3[%c1_39] : memref<8xf32, #tpu.memory_space<smem>>
    %127 = vector.broadcast %126 : f32 to vector<8x15xf32>
    %128 = arith.mulf %127, %119 : vector<8x15xf32>
    %129 = arith.addf %125, %128 : vector<8x15xf32>
    %c0_40 = arith.constant 0 : index
    %c0_41 = arith.constant 0 : index
    %c0_42 = arith.constant 0 : index
    %130 = vector.load %arg10[%c0_40, %c0_41, %c0_42] : memref<4x8x15xf32, #tpu.memory_space<vmem>>, vector<1x8x15xf32>
    %131 = vector.shape_cast %130 : vector<1x8x15xf32> to vector<8x15xf32>
    %132 = vector.shape_cast %129 : vector<8x15xf32> to vector<1x8x15xf32>
    tpu.vector_store %arg10[%c0_40, %c0_41, %c0_42], %132 {strides = array<i32>} : memref<4x8x15xf32, #tpu.memory_space<vmem>>, vector<1x8x15xf32>,
    %c1_43 = arith.constant 1 : index
    %133 = memref.load %arg4[%c1_43] : memref<4xf32, #tpu.memory_space<smem>>
    %c2_44 = arith.constant 2 : index
    %134 = memref.load %arg3[%c2_44] : memref<8xf32, #tpu.memory_space<smem>>
    %135 = vector.broadcast %134 : f32 to vector<8x15xf32>
    %136 = arith.mulf %135, %118 : vector<8x15xf32>
    %137 = vector.broadcast %133 : f32 to vector<8x15xf32>
    %138 = arith.addf %137, %136 : vector<8x15xf32>
    %c3_45 = arith.constant 3 : index
    %139 = memref.load %arg3[%c3_45] : memref<8xf32, #tpu.memory_space<smem>>
    %140 = vector.broadcast %139 : f32 to vector<8x15xf32>
    %141 = arith.mulf %140, %119 : vector<8x15xf32>
    %142 = arith.addf %138, %141 : vector<8x15xf32>
    %c1_46 = arith.constant 1 : index
    %c0_47 = arith.constant 0 : index
    %c0_48 = arith.constant 0 : index
    %143 = vector.load %arg10[%c1_46, %c0_47, %c0_48] : memref<4x8x15xf32, #tpu.memory_space<vmem>>, vector<1x8x15xf32>
    %144 = vector.shape_cast %143 : vector<1x8x15xf32> to vector<8x15xf32>
    %145 = vector.shape_cast %142 : vector<8x15xf32> to vector<1x8x15xf32>
    tpu.vector_store %arg10[%c1_46, %c0_47, %c0_48], %145 {strides = array<i32>} : memref<4x8x15xf32, #tpu.memory_space<vmem>>, vector<1x8x15xf32>,
    %c2_49 = arith.constant 2 : index
    %146 = memref.load %arg4[%c2_49] : memref<4xf32, #tpu.memory_space<smem>>
    %c4_50 = arith.constant 4 : index
    %147 = memref.load %arg3[%c4_50] : memref<8xf32, #tpu.memory_space<smem>>
    %148 = vector.broadcast %147 : f32 to vector<8x15xf32>
    %149 = arith.mulf %148, %118 : vector<8x15xf32>
    %150 = vector.broadcast %146 : f32 to vector<8x15xf32>
    %151 = arith.addf %150, %149 : vector<8x15xf32>
    %c5_51 = arith.constant 5 : index
    %152 = memref.load %arg3[%c5_51] : memref<8xf32, #tpu.memory_space<smem>>
    %153 = vector.broadcast %152 : f32 to vector<8x15xf32>
    %154 = arith.mulf %153, %119 : vector<8x15xf32>
    %155 = arith.addf %151, %154 : vector<8x15xf32>
    %c2_52 = arith.constant 2 : index
    %c0_53 = arith.constant 0 : index
    %c0_54 = arith.constant 0 : index
    %156 = vector.load %arg10[%c2_52, %c0_53, %c0_54] : memref<4x8x15xf32, #tpu.memory_space<vmem>>, vector<1x8x15xf32>
    %157 = vector.shape_cast %156 : vector<1x8x15xf32> to vector<8x15xf32>
    %158 = vector.shape_cast %155 : vector<8x15xf32> to vector<1x8x15xf32>
    tpu.vector_store %arg10[%c2_52, %c0_53, %c0_54], %158 {strides = array<i32>} : memref<4x8x15xf32, #tpu.memory_space<vmem>>, vector<1x8x15xf32>,
    %c3_55 = arith.constant 3 : index
    %159 = memref.load %arg4[%c3_55] : memref<4xf32, #tpu.memory_space<smem>>
    %c6_56 = arith.constant 6 : index
    %160 = memref.load %arg3[%c6_56] : memref<8xf32, #tpu.memory_space<smem>>
    %161 = vector.broadcast %160 : f32 to vector<8x15xf32>
    %162 = arith.mulf %161, %118 : vector<8x15xf32>
    %163 = vector.broadcast %159 : f32 to vector<8x15xf32>
    %164 = arith.addf %163, %162 : vector<8x15xf32>
    %c7_57 = arith.constant 7 : index
    %165 = memref.load %arg3[%c7_57] : memref<8xf32, #tpu.memory_space<smem>>
    %166 = vector.broadcast %165 : f32 to vector<8x15xf32>
    %167 = arith.mulf %166, %119 : vector<8x15xf32>
    %168 = arith.addf %164, %167 : vector<8x15xf32>
    %c3_58 = arith.constant 3 : index
    %c0_59 = arith.constant 0 : index
    %c0_60 = arith.constant 0 : index
    %169 = vector.load %arg10[%c3_58, %c0_59, %c0_60] : memref<4x8x15xf32, #tpu.memory_space<vmem>>, vector<1x8x15xf32>
    %170 = vector.shape_cast %169 : vector<1x8x15xf32> to vector<8x15xf32>
    %171 = vector.shape_cast %168 : vector<8x15xf32> to vector<1x8x15xf32>
    tpu.vector_store %arg10[%c3_58, %c0_59, %c0_60], %171 {strides = array<i32>} : memref<4x8x15xf32, #tpu.memory_space<vmem>>, vector<1x8x15xf32>,
    return
  }
  func.func @transform_0(%arg0: i32) -> i32 {
    %c0_i32 = arith.constant 0 : i32
    %c0_i32_0 = arith.constant 0 : i32
    return %c0_i32 : i32
  }
  func.func @transform_1(%arg0: i32) -> i32 {
    %c0_i32 = arith.constant 0 : i32
    %c0_i32_0 = arith.constant 0 : i32
    return %c0_i32 : i32
  }
  func.func @transform_2(%arg0: i32) -> i32 {
    %c0_i32 = arith.constant 0 : i32
    %c0_i32_0 = arith.constant 0 : i32
    return %c0_i32 : i32
  }
  func.func @transform_3(%arg0: i32) -> i32 {
    %c0_i32 = arith.constant 0 : i32
    %c0_i32_0 = arith.constant 0 : i32
    return %c0_i32 : i32
  }
  func.func @transform_4(%arg0: i32) -> (i32, i32, i32) {
    %c0_i32 = arith.constant 0 : i32
    %c0_i32_0 = arith.constant 0 : i32
    %c0_i32_1 = arith.constant 0 : i32
    return %c0_i32, %arg0, %c0_i32_0 : i32, i32, i32
  }
  func.func @transform_5(%arg0: i32) -> (i32, i32) {
    %c0_i32 = arith.constant 0 : i32
    %c0_i32_0 = arith.constant 0 : i32
    %c0_i32_1 = arith.constant 0 : i32
    return %c0_i32, %c0_i32_0 : i32, i32
  }
  func.func @transform_6(%arg0: i32) -> (i32, i32) {
    %c0_i32 = arith.constant 0 : i32
    %c0_i32_0 = arith.constant 0 : i32
    %c0_i32_1 = arith.constant 0 : i32
    return %c0_i32, %c0_i32_0 : i32, i32
  }
  func.func @transform_7(%arg0: i32) -> (i32, i32) {
    %c0_i32 = arith.constant 0 : i32
    %c0_i32_0 = arith.constant 0 : i32
    %c0_i32_1 = arith.constant 0 : i32
    return %c0_i32, %c0_i32_0 : i32, i32
  }
  func.func @transform_8(%arg0: i32) -> (i32, i32) {
    %c0_i32 = arith.constant 0 : i32
    %c0_i32_0 = arith.constant 0 : i32
    %c0_i32_1 = arith.constant 0 : i32
    return %c0_i32, %c0_i32_0 : i32, i32
  }
  func.func @transform_9(%arg0: i32) -> (i32, i32, i32) {
    %c0_i32 = arith.constant 0 : i32
    %c0_i32_0 = arith.constant 0 : i32
    %c0_i32_1 = arith.constant 0 : i32
    return %c0_i32, %arg0, %c0_i32_0 : i32, i32, i32
  }
}

</mosaic_0001>

<llo_original>
// kernel: tpu_custom_call.1
$region0: #{tpu_custom_call.1}
  #allocation0 [shape = 'u32[]', space=smem, size = 0x4, offset = 0x4, fixed_abs, tag = 'smem constant byte address 0x4 - core index']
  #allocation1 [shape = 'u32[144,128]{1,0:T(1,128)}', space=vmem, size = 0x12000, scoped, tag = 'internal scratch']
  %s0 = inlined_call_operand.vmem [shape: f32[16], index: 0, kind: input, shape index: {}]
  %s1 = inlined_call_operand.vmem [shape: f32[2], index: 1, kind: input, shape index: {}]
  %s2 = inlined_call_operand.hbm [shape: f32[8], index: 2, kind: input, shape index: {}]
  %s3 = inlined_call_operand.hbm [shape: f32[4], index: 3, kind: input, shape index: {}]
  %s4 = inlined_call_operand.vmem [shape: f32[4,8,16], index: 4, kind: input, shape index: {}]
  %s5 = inlined_call_operand.vmem [shape: f32[16,4], index: 5, kind: input, shape index: {}]
  %s6 = inlined_call_operand.hbm [shape: f32[1,4], index: 6, kind: input, shape index: {}]
  %s7 = inlined_call_operand.vmem [shape: f32[4,15], index: 7, kind: input, shape index: {}]
  %s8 = inlined_call_operand.vmem [shape: f32[1,15], index: 8, kind: input, shape index: {}]
  %s9 = inlined_call_operand.hbm [shape: f32[4,8,15], index: 9, kind: output, shape index: {}]
  %s10 = sld [smem:[#allocation0]]
  $region66: #{tpu_custom_call.1} parent=0
    _
  %s12 = ssub.s32 1, %s10
  %s13 = scalar_select 0, %s12, %s10
  $region1: #{tpu_custom_call.1} parent=0
    #allocation2 [shape = 'u8[512]{0}', space=smem, size = 0x200, scoped, tag = 'input window, operand 0, single buffered']
    #allocation3 [shape = 's32[1]{0}', space=sflag, size = 0x4, scoped, tag = 'scoped memory for tpu_custom_call.1']
    #allocation4 [shape = 's32[1]{0}', space=sflag, size = 0x4, scoped, tag = 'scoped memory for tpu_custom_call.1']
    #allocation5 [shape = 's32[1]{0}', space=sflag, size = 0x4, scoped, tag = 'scoped memory for tpu_custom_call.1']
    #allocation6 [shape = 's32[1]{0}', space=sflag, size = 0x4, scoped, tag = 'scoped memory for tpu_custom_call.1']
    #allocation7 [shape = 'u8[512]{0}', space=smem, size = 0x200, scoped, tag = 'input window, operand 1, single buffered']
    #allocation8 [shape = 's32[1]{0}', space=sflag, size = 0x4, scoped, tag = 'scoped memory for tpu_custom_call.1']
    #allocation9 [shape = 'u8[512]{0}', space=smem, size = 0x200, scoped, tag = 'input window, operand 2, single buffered']
    #allocation10 [shape = 'u8[512]{0}', space=smem, size = 0x200, scoped, tag = 'input window, operand 3, single buffered']
    #allocation11 [shape = 's32[1]{0}', space=sflag, size = 0x4, scoped, tag = 'scoped memory for tpu_custom_call.1']
    #allocation12 [shape = 'u8[512]{0}', space=vmem, size = 0x400, scoped, tag = 'input window, operand 6, single buffered']
    #allocation13 [shape = 'u8[16384]{0}', space=vmem, size = 0x4000, scoped, tag = 'output window, operand 0, single buffered']
    %14 = vsyncpa [#allocation6], 0
    %15 = vsyncpa [#allocation8], 0
    %16 = vsyncpa [#allocation5], 0
    %17 = vsyncpa [#allocation11], 0
    %18 = vsyncpa [#allocation3], 0
    %19 = vsyncpa [#allocation4], 0
    // Predicated region
    $region2: #{tpu_custom_call.1} parent=1 // pred_check
      _
    $region3: #{tpu_custom_call.1} parent=1 // pred_check_branch
      %21 = sbr.rel (0) target = $region5
    $region4: #{tpu_custom_call.1} parent=1 // pred_region
      %s23 = ssub.s32 16, 16
      %24 = vsyncadd [#allocation6], %s23
      %s26 = sshll.u32 %s0, 4
      %s27 = int_to_ptr.vmem [resolvable:$true] %s26
      %29 = dma.vmem_to_smem %s27, 16, [#allocation2], [#allocation6]
    $region5: #{tpu_custom_call.1} parent=1 // pred_fallthru
      _
    // Predicated region
    $region6: #{tpu_custom_call.1} parent=1 // pred_check
      _
    $region7: #{tpu_custom_call.1} parent=1 // pred_check_branch
      %31 = sbr.rel (0) target = $region9
    $region8: #{tpu_custom_call.1} parent=1 // pred_region
      %s33 = ssub.s32 16, 16
      %34 = vsyncadd [#allocation8], %s33
      %s36 = sshll.u32 %s1, 4
      %s37 = int_to_ptr.vmem [resolvable:$true] %s36
      %39 = dma.vmem_to_smem %s37, 16, [#allocation7], [#allocation8]
    $region9: #{tpu_custom_call.1} parent=1 // pred_fallthru
      _
    // Predicated region
    $region10: #{tpu_custom_call.1} parent=1 // pred_check
      _
    $region11: #{tpu_custom_call.1} parent=1 // pred_check_branch
      %41 = sbr.rel (0) target = $region13
    $region12: #{tpu_custom_call.1} parent=1 // pred_region
      %s43 = ssub.s32 16, 16
      %44 = vsyncadd [#allocation5], %s43
      %47 = dma.hbm_to_smem %s2, 16, [#allocation9], [#allocation5]
    $region13: #{tpu_custom_call.1} parent=1 // pred_fallthru
      _
    // Predicated region
    $region14: #{tpu_custom_call.1} parent=1 // pred_check
      _
    $region15: #{tpu_custom_call.1} parent=1 // pred_check_branch
      %49 = sbr.rel (0) target = $region17
    $region16: #{tpu_custom_call.1} parent=1 // pred_region
      %s51 = ssub.s32 16, 16
      %52 = vsyncadd [#allocation11], %s51
      %55 = dma.hbm_to_smem %s3, 16, [#allocation10], [#allocation11]
    $region17: #{tpu_custom_call.1} parent=1 // pred_fallthru
      _
    // Predicated region
    $region18: #{tpu_custom_call.1} parent=1 // pred_check
      _
    $region19: #{tpu_custom_call.1} parent=1 // pred_check_branch
      %57 = sbr.rel (0) target = $region21
    $region20: #{tpu_custom_call.1} parent=1 // pred_region
      _
    $region21: #{tpu_custom_call.1} parent=1 // pred_fallthru
      _
    // Predicated region
    $region22: #{tpu_custom_call.1} parent=1 // pred_check
      _
    $region23: #{tpu_custom_call.1} parent=1 // pred_check_branch
      %59 = sbr.rel (0) target = $region25
    $region24: #{tpu_custom_call.1} parent=1 // pred_region
      _
    $region25: #{tpu_custom_call.1} parent=1 // pred_fallthru
      _
    // Predicated region
    $region26: #{tpu_custom_call.1} parent=1 // pred_check
      _
    $region27: #{tpu_custom_call.1} parent=1 // pred_check_branch
      %61 = sbr.rel (0) target = $region29
    $region28: #{tpu_custom_call.1} parent=1 // pred_region
      %s63 = ssub.s32 16, 16
      %64 = vsyncadd [#allocation3], %s63
      %s66 = sshll.u32 [#allocation12], 4
      %s67 = int_to_ptr.vmem [resolvable:$true] %s66
      %69 = dma.hbm_to_vmem [thread:$0]  %s6, 16, %s67, [#allocation3]
    $region29: #{tpu_custom_call.1} parent=1 // pred_fallthru
      _
    // Predicated region
    $region30: #{tpu_custom_call.1} parent=1 // pred_check
      _
    $region31: #{tpu_custom_call.1} parent=1 // pred_check_branch
      %71 = sbr.rel (0) target = $region33
    $region32: #{tpu_custom_call.1} parent=1 // pred_region
      _
    $region33: #{tpu_custom_call.1} parent=1 // pred_fallthru
      _
    // Predicated region
    $region34: #{tpu_custom_call.1} parent=1 // pred_check
      _
    $region35: #{tpu_custom_call.1} parent=1 // pred_check_branch
      %73 = sbr.rel (0) target = $region37
    $region36: #{tpu_custom_call.1} parent=1 // pred_region
      _
    $region37: #{tpu_custom_call.1} parent=1 // pred_fallthru
      _
    // Predicated region
    $region38: #{tpu_custom_call.1} parent=1 // pred_check
      _
    $region39: #{tpu_custom_call.1} parent=1 // pred_check_branch
      %75 = sbr.rel (0) target = $region41
    $region40: #{tpu_custom_call.1} parent=1 // pred_region
      %76 = dma.done [#allocation6], 16
    $region41: #{tpu_custom_call.1} parent=1 // pred_fallthru
      _
    // Predicated region
    $region42: #{tpu_custom_call.1} parent=1 // pred_check
      _
    $region43: #{tpu_custom_call.1} parent=1 // pred_check_branch
      %78 = sbr.rel (0) target = $region45
    $region44: #{tpu_custom_call.1} parent=1 // pred_region
      %79 = dma.done [#allocation8], 16
    $region45: #{tpu_custom_call.1} parent=1 // pred_fallthru
      _
    // Predicated region
    $region46: #{tpu_custom_call.1} parent=1 // pred_check
      _
    $region47: #{tpu_custom_call.1} parent=1 // pred_check_branch
      %81 = sbr.rel (0) target = $region49
    $region48: #{tpu_custom_call.1} parent=1 // pred_region
      %82 = dma.done [#allocation5], 16
    $region49: #{tpu_custom_call.1} parent=1 // pred_fallthru
      _
    // Predicated region
    $region50: #{tpu_custom_call.1} parent=1 // pred_check
      _
    $region51: #{tpu_custom_call.1} parent=1 // pred_check_branch
      %84 = sbr.rel (0) target = $region53
    $region52: #{tpu_custom_call.1} parent=1 // pred_region
      %85 = dma.done [#allocation11], 16
    $region53: #{tpu_custom_call.1} parent=1 // pred_fallthru
      _
    // Predicated region
    $region54: #{tpu_custom_call.1} parent=1 // pred_check
      _
    $region55: #{tpu_custom_call.1} parent=1 // pred_check_branch
      %87 = sbr.rel (0) target = $region57
    $region56: #{tpu_custom_call.1} parent=1 // pred_region
      %88 = dma.done [#allocation3], 16
    $region57: #{tpu_custom_call.1} parent=1 // pred_fallthru
      _
    %89 = sfence
    %v90 = vld [vmem:[%s4] sm:$0xff]
    %s91 = sld [smem:[#allocation2]]
    %v92 = vstv %s91
    %v93 = vmul.f32 %v92, %v90
    %v94 = vadd.f32 %v93, 0.0
    %s95 = sld [smem:[#allocation2 + $0x1]]
    %v96 = vstv %s95
    %v97 = vmul.f32 %v96, %v90
    %v98 = vadd.f32 %v97, 0.0
    %s99 = sld [smem:[#allocation2 + $0x8]]
    %v100 = vstv %s99
    %v101 = vmul.f32 %v100, %v90
    %v102 = vadd.f32 %v101, 0.0
    %s103 = sld [smem:[#allocation2 + $0x9]]
    %v104 = vstv %s103
    %v105 = vmul.f32 %v104, %v90
    %v106 = vadd.f32 %v105, 0.0
    %s107 = scalar_lea.vmem %s4, 8
    %v108 = vld [vmem:[%s107] sm:$0xff]
    %s109 = sld [smem:[#allocation2 + $0x2]]
    %v110 = vstv %s109
    %v111 = vmul.f32 %v110, %v108
    %v112 = vadd.f32 %v94, %v111
    %s113 = sld [smem:[#allocation2 + $0x3]]
    %v114 = vstv %s113
    %v115 = vmul.f32 %v114, %v108
    %v116 = vadd.f32 %v98, %v115
    %s117 = sld [smem:[#allocation2 + $0xa]]
    %v118 = vstv %s117
    %v119 = vmul.f32 %v118, %v108
    %v120 = vadd.f32 %v102, %v119
    %s121 = sld [smem:[#allocation2 + $0xb]]
    %v122 = vstv %s121
    %v123 = vmul.f32 %v122, %v108
    %v124 = vadd.f32 %v106, %v123
    %s125 = scalar_lea.vmem %s4, 16
    %v126 = vld [vmem:[%s125] sm:$0xff]
    %s127 = sld [smem:[#allocation2 + $0x4]]
    %v128 = vstv %s127
    %v129 = vmul.f32 %v128, %v126
    %v130 = vadd.f32 %v112, %v129
    %s131 = sld [smem:[#allocation2 + $0x5]]
    %v132 = vstv %s131
    %v133 = vmul.f32 %v132, %v126
    %v134 = vadd.f32 %v116, %v133
    %s135 = sld [smem:[#allocation2 + $0xc]]
    %v136 = vstv %s135
    %v137 = vmul.f32 %v136, %v126
    %v138 = vadd.f32 %v120, %v137
    %s139 = sld [smem:[#allocation2 + $0xd]]
    %v140 = vstv %s139
    %v141 = vmul.f32 %v140, %v126
    %v142 = vadd.f32 %v124, %v141
    %s143 = scalar_lea.vmem %s4, 24
    %v144 = vld [vmem:[%s143] sm:$0xff]
    %s145 = sld [smem:[#allocation2 + $0x6]]
    %v146 = vstv %s145
    %v147 = vmul.f32 %v146, %v144
    %v148 = vadd.f32 %v130, %v147
    %s149 = sld [smem:[#allocation2 + $0x7]]
    %v150 = vstv %s149
    %v151 = vmul.f32 %v150, %v144
    %v152 = vadd.f32 %v134, %v151
    %s153 = sld [smem:[#allocation2 + $0xe]]
    %v154 = vstv %s153
    %v155 = vmul.f32 %v154, %v144
    %v156 = vadd.f32 %v138, %v155
    %s157 = sld [smem:[#allocation2 + $0xf]]
    %v158 = vstv %s157
    %v159 = vmul.f32 %v158, %v144
    %v160 = vadd.f32 %v142, %v159
    %vm161 = vcmask 1047680
    %162 = vrot.lane.b32.xlu0 %v152, 16
    %v163 = vpop.permute.xlu0 %162
    %v164 = vsel %vm161, %v163, %v152
    %165 = vrot.lane.b32.xlu0 %v164, 16
    %v166 = vpop.permute.xlu0 %165
    %v167 = vsel %vm161, %v166, %v152
    %169 = vrot.lane.b32.xlu0 %v167, 127
    %v170 = vpop.permute.xlu0 %169
    %v172 = vadd.f32 %v148, %v170
    %s173 = sld [smem:[#allocation7]]
    %v174 = vstv %s173
    %v175 = vadd.f32 %v172, %v174
    %vm176 = vcmp.gt.f32.partialorder %v175, 0.0
    %v177 = vmul.f32 %v175, 0.01
    %v178 = vsel %vm176, %v175, %v177
    %179 = vrot.lane.b32.xlu0 %v160, 16
    %v180 = vpop.permute.xlu0 %179
    %v181 = vsel %vm161, %v180, %v160
    %182 = vrot.lane.b32.xlu0 %v181, 16
    %v183 = vpop.permute.xlu0 %182
    %v184 = vsel %vm161, %v183, %v160
    %186 = vrot.lane.b32.xlu0 %v184, 127
    %v187 = vpop.permute.xlu0 %186
    %v189 = vadd.f32 %v156, %v187
    %s190 = sld [smem:[#allocation7 + $0x1]]
    %v191 = vstv %s190
    %v192 = vadd.f32 %v189, %v191
    %vm193 = vcmp.gt.f32.partialorder %v192, 0.0
    %v194 = vmul.f32 %v192, 0.01
    %v195 = vsel %vm193, %v192, %v194
    %v196 = vmax.f32 %v178, %v195
    %197 = vrot.lane.b32.xlu0 %v196, 16
    %v198 = vpop.permute.xlu0 %197
    %v199 = vsel %vm161, %v198, %v196
    %200 = vrot.lane.b32.xlu0 %v199, 16
    %v201 = vpop.permute.xlu0 %200
    %v202 = vsel %vm161, %v201, %v196
    %204 = vrot.lane.b32.xlu0 %v202, 127
    %v205 = vpop.permute.xlu0 %204
    %v207 = vmax.f32 %v196, %v205
    %v208 = vld [vmem:[%s5] sm:$0xff]
    %v209 = vld [vmem:[%s5 + $0x8] sm:$0xff]
    %v210 = vld [vmem:[#allocation12] sm:$0x1]
    %v212 = vlaneseq
    %v213 = vshrl.u32 %v212, 7
    %v214 = vsub.s32 0, %v213
    %v215 = vrot.slane %v210, %v214
    %vm217 = vcmask 130048
    %v219 = vsel %vm217, %v207, 0
    %221 = vmatprep.subr.mxu0 0.0
    %222 = vmatpush1.msra.mxu0 %v208
    %223 = vmatprep.subr.mxu0 0.0
    %224 = vmatpush1.msra.mxu0 %v209
    %225 = vmatprep.subr.mxu0 0.0
    %226 = vmatpush1.msra.mxu0 0.0
    %227 = vmatprep.subr.mxu0 0.0
    %228 = vmatpush1.msra.mxu0 0.0
    %229 = vmatprep.subr.mxu0 0.0
    %230 = vmatpush1.msra.mxu0 0.0
    %231 = vmatprep.subr.mxu0 0.0
    %232 = vmatpush1.msra.mxu0 0.0
    %233 = vmatprep.subr.mxu0 0.0
    %234 = vmatpush1.msra.mxu0 0.0
    %235 = vmatprep.subr.mxu0 0.0
    %236 = vmatpush1.msra.mxu0 0.0
    %237 = vmatprep.subr.mxu0 0.0
    %238 = vmatpush1.msra.mxu0 0.0
    %239 = vmatprep.subr.mxu0 0.0
    %240 = vmatpush1.msra.mxu0 0.0
    %241 = vmatprep.subr.mxu0 0.0
    %242 = vmatpush1.msra.mxu0 0.0
    %243 = vmatprep.subr.mxu0 0.0
    %244 = vmatpush1.msra.mxu0 0.0
    %245 = vmatprep.subr.mxu0 0.0
    %246 = vmatpush1.msra.mxu0 0.0
    %247 = vmatprep.subr.mxu0 0.0
    %248 = vmatpush1.msra.mxu0 0.0
    %249 = vmatprep.subr.mxu0 0.0
    %250 = vmatpush1.msra.mxu0 0.0
    %251 = vmatprep.subr.mxu0 0.0
    %252 = vmatpush1.msra.mxu0 0.0
    %253 = vmatprep.subr.mxu0 0.0
    %254 = vmatpush1.msra.mxu0 0.0
    %255 = vmatprep.subr.mxu0 0.0
    %256 = vmatpush1.msra.mxu0 0.0
    %257 = vmatprep.subr.mxu0 0.0
    %258 = vmatpush1.msra.mxu0 0.0
    %259 = vmatprep.subr.mxu0 0.0
    %260 = vmatpush1.msra.mxu0 0.0
    %261 = vmatprep.subr.mxu0 0.0
    %262 = vmatpush1.msra.mxu0 0.0
    %263 = vmatprep.subr.mxu0 0.0
    %264 = vmatpush1.msra.mxu0 0.0
    %265 = vmatprep.subr.mxu0 0.0
    %266 = vmatpush1.msra.mxu0 0.0
    %267 = vmatprep.subr.mxu0 0.0
    %268 = vmatpush1.msra.mxu0 0.0
    %269 = vmatprep.subr.mxu0 0.0
    %270 = vmatpush1.msra.mxu0 0.0
    %271 = vmatprep.subr.mxu0 0.0
    %272 = vmatpush1.msra.mxu0 0.0
    %273 = vmatprep.subr.mxu0 0.0
    %274 = vmatpush1.msra.mxu0 0.0
    %275 = vmatprep.subr.mxu0 0.0
    %276 = vmatpush1.msra.mxu0 0.0
    %277 = vmatprep.subr.mxu0 0.0
    %278 = vmatpush1.msra.mxu0 0.0
    %279 = vmatprep.subr.mxu0 0.0
    %280 = vmatpush1.msra.mxu0 0.0
    %281 = vmatprep.subr.mxu0 0.0
    %282 = vmatpush1.msra.mxu0 0.0
    %283 = vmatprep.subr.mxu0 0.0
    %284 = vmatpush1.msra.mxu0 0.0
    %285 = vmatprep.mubr.f32.mxu0 0.0
    %286 = vmatmul.mubr.f32.gmra.mrb[0].mxu0 %v219
    %v287 = vpop.f32.mrb[0].mxu0
    %v288 = vadd.f32 %v215, %v287
    %v289 = vpop.f32.mrb[0].mxu0
    %290 = vdwg.mxu0
    %vm291 = vcmp.gt.f32.partialorder %v288, 0.0
    %v292 = vmul.f32 %v288, 0.01
    %v293 = vsel %vm291, %v288, %v292
    %v294 = vld [vmem:[%s7] sm:$0xf]
    %v295 = vld [vmem:[%s8] sm:$0x1]
    %v297 = vlaneseq
    %v298 = vshrl.u32 %v297, 7
    %v299 = vsub.s32 0, %v298
    %v300 = vrot.slane %v295, %v299
    %vm302 = vcmask 31744
    %v304 = vsel %vm302, %v293, 0
    %vm306 = vcmask 1043456
    %v308 = vsel %vm306, %v294, 0
    %310 = vmatprep.subr.mxu0 0.0
    %311 = vmatpush1.msra.mxu0 %v308
    %312 = vmatprep.subr.mxu0 0.0
    %313 = vmatpush1.msra.mxu0 0.0
    %314 = vmatprep.subr.mxu0 0.0
    %315 = vmatpush1.msra.mxu0 0.0
    %316 = vmatprep.subr.mxu0 0.0
    %317 = vmatpush1.msra.mxu0 0.0
    %318 = vmatprep.subr.mxu0 0.0
    %319 = vmatpush1.msra.mxu0 0.0
    %320 = vmatprep.subr.mxu0 0.0
    %321 = vmatpush1.msra.mxu0 0.0
    %322 = vmatprep.subr.mxu0 0.0
    %323 = vmatpush1.msra.mxu0 0.0
    %324 = vmatprep.subr.mxu0 0.0
    %325 = vmatpush1.msra.mxu0 0.0
    %326 = vmatprep.subr.mxu0 0.0
    %327 = vmatpush1.msra.mxu0 0.0
    %328 = vmatprep.subr.mxu0 0.0
    %329 = vmatpush1.msra.mxu0 0.0
    %330 = vmatprep.subr.mxu0 0.0
    %331 = vmatpush1.msra.mxu0 0.0
    %332 = vmatprep.subr.mxu0 0.0
    %333 = vmatpush1.msra.mxu0 0.0
    %334 = vmatprep.subr.mxu0 0.0
    %335 = vmatpush1.msra.mxu0 0.0
    %336 = vmatprep.subr.mxu0 0.0
    %337 = vmatpush1.msra.mxu0 0.0
    %338 = vmatprep.subr.mxu0 0.0
    %339 = vmatpush1.msra.mxu0 0.0
    %340 = vmatprep.subr.mxu0 0.0
    %341 = vmatpush1.msra.mxu0 0.0
    %342 = vmatprep.subr.mxu0 0.0
    %343 = vmatpush1.msra.mxu0 0.0
    %344 = vmatprep.subr.mxu0 0.0
    %345 = vmatpush1.msra.mxu0 0.0
    %346 = vmatprep.subr.mxu0 0.0
    %347 = vmatpush1.msra.mxu0 0.0
    %348 = vmatprep.subr.mxu0 0.0
    %349 = vmatpush1.msra.mxu0 0.0
    %350 = vmatprep.subr.mxu0 0.0
    %351 = vmatpush1.msra.mxu0 0.0
    %352 = vmatprep.subr.mxu0 0.0
    %353 = vmatpush1.msra.mxu0 0.0
    %354 = vmatprep.subr.mxu0 0.0
    %355 = vmatpush1.msra.mxu0 0.0
    %356 = vmatprep.subr.mxu0 0.0
    %357 = vmatpush1.msra.mxu0 0.0
    %358 = vmatprep.subr.mxu0 0.0
    %359 = vmatpush1.msra.mxu0 0.0
    %360 = vmatprep.subr.mxu0 0.0
    %361 = vmatpush1.msra.mxu0 0.0
    %362 = vmatprep.subr.mxu0 0.0
    %363 = vmatpush1.msra.mxu0 0.0
    %364 = vmatprep.subr.mxu0 0.0
    %365 = vmatpush1.msra.mxu0 0.0
    %366 = vmatprep.subr.mxu0 0.0
    %367 = vmatpush1.msra.mxu0 0.0
    %368 = vmatprep.subr.mxu0 0.0
    %369 = vmatpush1.msra.mxu0 0.0
    %370 = vmatprep.subr.mxu0 0.0
    %371 = vmatpush1.msra.mxu0 0.0
    %372 = vmatprep.subr.mxu0 0.0
    %373 = vmatpush1.msra.mxu0 0.0
    %374 = vmatprep.mubr.f32.mxu0 0.0
    %375 = vmatmul.mubr.f32.gmra.mrb[0].mxu0 %v304
    %v376 = vpop.f32.mrb[0].mxu0
    %v377 = vadd.f32 %v300, %v376
    %v378 = vpop.f32.mrb[0].mxu0
    %379 = vdwg.mxu0
    %vm380 = vcmp.gt.f32.partialorder %v377, 0.0
    %v381 = vmul.f32 %v377, 0.01
    %v382 = vsel %vm380, %v377, %v381
    %vm383 = vcmask 1047672
    %384 = vrot.lane.b32.xlu0 %v382, 15
    %v385 = vpop.permute.xlu0 %384
    %v386 = vsel %vm383, %v385, %v382
    %387 = vrot.lane.b32.xlu0 %v386, 15
    %v388 = vpop.permute.xlu0 %387
    %v389 = vsel %vm383, %v388, %v382
    %s390 = sld [smem:[#allocation10]]
    %s391 = sld [smem:[#allocation9]]
    %v392 = vstv %s391
    %v393 = vmul.f32 %v392, %v382
    %v394 = vstv %s390
    %v395 = vadd.f32 %v394, %v393
    %s396 = sld [smem:[#allocation9 + $0x1]]
    %v397 = vstv %s396
    %v398 = vmul.f32 %v397, %v389
    %400 = vrot.lane.b32.xlu0 %v398, 114
    %v401 = vpop.permute.xlu0 %400
    %v403 = vadd.f32 %v395, %v401
    %vm404 = vcmask 121856
    %405 = vst.msk [vmem:[#allocation13] sm:$0xff] %vm404, %v403
    %s406 = sld [smem:[#allocation10 + $0x1]]
    %s407 = sld [smem:[#allocation9 + $0x2]]
    %v408 = vstv %s407
    %v409 = vmul.f32 %v408, %v382
    %v410 = vstv %s406
    %v411 = vadd.f32 %v410, %v409
    %s412 = sld [smem:[#allocation9 + $0x3]]
    %v413 = vstv %s412
    %v414 = vmul.f32 %v413, %v389
    %416 = vrot.lane.b32.xlu0 %v414, 114
    %v417 = vpop.permute.xlu0 %416
    %v419 = vadd.f32 %v411, %v417
    %s420 = scalar_lea.vmem [#allocation13], 8
    %421 = vst.msk [vmem:[%s420] sm:$0xff] %vm404, %v419
    %s422 = sld [smem:[#allocation10 + $0x2]]
    %s423 = sld [smem:[#allocation9 + $0x4]]
    %v424 = vstv %s423
    %v425 = vmul.f32 %v424, %v382
    %v426 = vstv %s422
    %v427 = vadd.f32 %v426, %v425
    %s428 = sld [smem:[#allocation9 + $0x5]]
    %v429 = vstv %s428
    %v430 = vmul.f32 %v429, %v389
    %432 = vrot.lane.b32.xlu0 %v430, 114
    %v433 = vpop.permute.xlu0 %432
    %v435 = vadd.f32 %v427, %v433
    %s436 = scalar_lea.vmem [#allocation13], 16
    %437 = vst.msk [vmem:[%s436] sm:$0xff] %vm404, %v435
    %s438 = sld [smem:[#allocation10 + $0x3]]
    %s439 = sld [smem:[#allocation9 + $0x6]]
    %v440 = vstv %s439
    %v441 = vmul.f32 %v440, %v382
    %v442 = vstv %s438
    %v443 = vadd.f32 %v442, %v441
    %s444 = sld [smem:[#allocation9 + $0x7]]
    %v445 = vstv %s444
    %v446 = vmul.f32 %v445, %v389
    %448 = vrot.lane.b32.xlu0 %v446, 114
    %v449 = vpop.permute.xlu0 %448
    %v451 = vadd.f32 %v443, %v449
    %s452 = scalar_lea.vmem [#allocation13], 24
    %453 = vst.msk [vmem:[%s452] sm:$0xff] %vm404, %v451
    // Predicated region
    $region58: #{tpu_custom_call.1} parent=1 // pred_check
      _
    $region59: #{tpu_custom_call.1} parent=1 // pred_check_branch
      %455 = sbr.rel (0) target = $region61
    $region60: #{tpu_custom_call.1} parent=1 // pred_region
      %s457 = ssub.s32 512, 512
      %458 = vsyncadd [#allocation4], %s457
      %s459 = sshll.u32 [#allocation13], 4
      %s460 = int_to_ptr.vmem [resolvable:$true] %s459
      %465 = dma.vmem_to_hbm [thread:$0]  %s460, 512, %s9, [#allocation4], 128, 128, 8
    $region61: #{tpu_custom_call.1} parent=1 // pred_fallthru
      _
    // Predicated region
    $region62: #{tpu_custom_call.1} parent=1 // pred_check
      _
    $region63: #{tpu_custom_call.1} parent=1 // pred_check_branch
      %467 = sbr.rel (0) target = $region65
    $region64: #{tpu_custom_call.1} parent=1 // pred_region
      %468 = dma.done [#allocation4], 512
    $region65: #{tpu_custom_call.1} parent=1 // pred_fallthru
      _
    %469 = vsyncpa [#allocation3], 1
    %470 = vsyncpa [#allocation4], 1
    %471 = vsyncpa [#allocation5], 1
    %472 = vsyncpa [#allocation11], 1
    %473 = vsyncpa [#allocation6], 1
    %474 = vsyncpa [#allocation8], 1

</llo_original>
